<compile_context>
chip_gen: v7x
topology: tpu7x:2x2x1
jax: 0.10.0
libtpu: 0.0.40
codegen_flags: <defaults>
</compile_context>

<pallas_src>
import functools

import jax
import jax.numpy as jnp
from jax.experimental import pallas as pl
from jax.experimental.pallas import tpu as pltpu

TM = 128  # token (row) tile = full MXU height; partial expert tiles zero-padded


def _pick_tn(d_out, d_in):
    """Lane-dense output tile.  Prefer the full d_out when the bf16 weight slice
    fits the per-block budget (fewest grid steps, x read once); otherwise the
    largest multiple-of-128 divisor that fits; odd d_out -> full-dim block."""
    w_block_budget = 4 * 2**20  # bytes per weight block (Pallas double-buffers)
    if d_out % 128 == 0 and 2 * d_in * d_out <= w_block_budget:
        return d_out
    for tn in (1024, 512, 384, 256, 128):
        if d_out % tn == 0 and 2 * d_in * tn <= w_block_budget:
            return tn
    return 128 if d_out % 128 == 0 else d_out


def _vmem_limit_bytes():
    """Scoped-VMEM limit sized per generation (headroom on v7x's 64 MiB)."""
    try:
        cap = pltpu.get_tpu_info().vmem_capacity_bytes
        return int(min(100 * 2**20, cap * 3 // 4))
    except Exception:
        return 48 * 2**20  # safe on v5e / v6e / v7x


def _bitlinear_tile_kernel(eid_ref, x_ref, w_ref, winv_ref, o_ref):
    """One (out-col tile, row tile) step: activation quant + bf16 MXU matmul."""
    del eid_ref  # consumed only by the index_maps
    t = pl.program_id(1)  # row-tile index (inner grid axis)

    x = x_ref[...].astype(jnp.float32)                           # (TM, D_in)
    # BitNet b1.58 activation quant: per-row abs-max int8 (values kept integer).
    amax = jnp.maximum(jnp.max(jnp.abs(x), axis=-1, keepdims=True), 1e-5)
    x_q = jnp.clip(jnp.round(x * (127.0 / amax)), -128.0, 127.0)

    # |x_q| <= 127 and weights ternary -> bf16 matmul is bit-exact and runs at
    # full MXU rate on every generation (f32 accumulation).
    acc = jnp.dot(x_q.astype(jnp.bfloat16), w_ref[0],
                  preferred_element_type=jnp.float32)            # (TM, TN)

    # Fold both dequant scales after the dot; winv already carries the 1/127:
    #   out = (x_q @ w_q.T) * (amax/127) * mean|W|
    o_ref[...] = (acc * (amax * winv_ref[t])).astype(o_ref.dtype)


@functools.partial(jax.jit, static_argnames=("expert_size", "tm", "tn"))
def _forward(inputs, weights, tile_eid, expert_size, tm, tn):
    _, d_in = inputs.shape
    _, d_out, _ = weights.shape

    # ---- Prepass (once per call): BitNet ternary weight quant, pre-transposed ----
    w_f32 = weights.astype(jnp.float32)
    w_inv = jnp.maximum(jnp.mean(jnp.abs(w_f32), axis=(1, 2)), 1e-5)     # (E,) = 1/w_scale
    w_q = jnp.clip(jnp.round(w_f32 / w_inv[:, None, None]), -1.0, 1.0)   # ternary
    w_q = jnp.transpose(w_q, (0, 2, 1)).astype(jnp.bfloat16)             # (E, D_in, D_out)

    # ---- Pad every expert's row segment up to a multiple of tm (zero rows) ----
    segs, off = [], 0
    for s in expert_size:
        seg = inputs[off:off + s]
        pad = (-s) % tm
        if pad:
            seg = jnp.concatenate([seg, jnp.zeros((pad, d_in), inputs.dtype)], axis=0)
        segs.append(seg)
        off += s
    x_pad = segs[0] if len(segs) == 1 else jnp.concatenate(segs, axis=0)
    tp = x_pad.shape[0]
    n_row_tiles = tp // tm
    n_out_tiles = pl.cdiv(d_out, tn)

    # Per-row-tile combined dequant factor mean|W_e| / 127, read as SMEM scalars.
    w_inv_tiles = (w_inv * (1.0 / 127.0))[tile_eid]                      # (n_row_tiles,) f32

    grid_spec = pltpu.PrefetchScalarGridSpec(
        num_scalar_prefetch=1,
        # D_out tile OUTER: consecutive row tiles of one expert hit an identical
        # weight block index -> weight DMA skipped; each expert's weights stream
        # from HBM exactly once overall.
        grid=(n_out_tiles, n_row_tiles),
        in_specs=[
            pl.BlockSpec((tm, d_in), lambda n, t, eid: (t, 0)),
            pl.BlockSpec((1, d_in, tn), lambda n, t, eid: (eid[t], 0, n)),
            pl.BlockSpec(memory_space=pltpu.MemorySpace.SMEM),
        ],
        out_specs=pl.BlockSpec((tm, tn), lambda n, t, eid: (t, n)),
    )

    out_dtype = inputs.dtype
    cost = pl.CostEstimate(
        flops=2 * tp * d_in * d_out,
        transcendentals=0,
        bytes_accessed=int(n_out_tiles * tp * d_in * inputs.dtype.itemsize
                           + w_q.size * 2
                           + tp * d_out * jnp.dtype(out_dtype).itemsize),
    )

    out_pad = pl.pallas_call(
        _bitlinear_tile_kernel,
        out_shape=jax.ShapeDtypeStruct((tp, d_out), out_dtype),
        grid_spec=grid_spec,
        compiler_params=pltpu.CompilerParams(
            dimension_semantics=("parallel", "parallel"),
            vmem_limit_bytes=_vmem_limit_bytes(),
        ),
        cost_estimate=cost,
    )(tile_eid, x_pad, w_q, w_inv_tiles)

    # ---- Drop pad rows, restoring torch.split/cat row order ----
    outs, poff = [], 0
    for s in expert_size:
        outs.append(out_pad[poff:poff + s])
        poff += s + ((-s) % tm)
    return outs[0] if len(outs) == 1 else jnp.concatenate(outs, axis=0)


def parallel_experts(inputs, weights, expert_size):
    """JAX/Pallas equivalent of ParallelExperts.forward(inputs, expert_size)."""
    expert_size = tuple(int(s) for s in expert_size)
    t_total, d_in = inputs.shape
    assert sum(expert_size) == t_total, "expert_size must sum to number of rows"
    num_experts, d_out, w_d_in = weights.shape
    assert w_d_in == d_in and num_experts == len(expert_size)

    tn = _pick_tn(d_out, d_in)

    # Static per-row-tile expert schedule (torch.split sizes are plain ints).
    # TODO(synk): for production MoE routing (counts change per step) use a fixed
    # max-tile grid + pl.when empty-tile skip to avoid per-shape recompiles.
    tile_eid = []
    for e, s in enumerate(expert_size):
        tile_eid += [e] * ((s + TM - 1) // TM)
    tile_eid = jnp.asarray(tile_eid, jnp.int32)

    return _forward(inputs, weights, tile_eid, expert_size, TM, tn)


def _reference(inputs, weights, expert_size):
    """Pure-JAX reference of the same forward pass (BitNet b1.58 semantics)."""
    outs, off = [], 0
    for e, s in enumerate(expert_size):
        x = inputs[off:off + s].astype(jnp.float32)
        w = weights[e].astype(jnp.float32)
        a_scale = 127.0 / jnp.maximum(
            jnp.max(jnp.abs(x), axis=-1, keepdims=True), 1e-5)
        x_q = jnp.clip(jnp.round(x * a_scale), -128.0, 127.0) / a_scale
        w_scale = 1.0 / jnp.maximum(jnp.mean(jnp.abs(w)), 1e-5)
        w_q = jnp.clip(jnp.round(w * w_scale), -1.0, 1.0) / w_scale
        outs.append(x_q @ w_q.T)
        off += s
    return jnp.concatenate(outs, axis=0).astype(inputs.dtype)


if __name__ == "__main__":
    num_experts = 4
    input_size = 256
    output_size = 256
    # Deliberately NOT multiples of TM=128 to exercise the pad/drop path.
    expert_size = (96, 160, 64, 192)          # per-expert token counts (sum = 512)
    total_tokens = sum(expert_size)

    key = jax.random.PRNGKey(0)
    k_x, k_w = jax.random.split(key)
    inputs = jax.random.normal(k_x, (total_tokens, input_size), jnp.float32)
    # reset_parameters(): uniform(-1/input_size, 1/input_size)
    weights = jax.random.uniform(
        k_w, (num_experts, output_size, input_size), jnp.float32,
        minval=-1.0 / input_size, maxval=1.0 / input_size)

    out = parallel_experts(inputs, weights, expert_size)
    out = jax.block_until_ready(out)

    ref = _reference(inputs, weights, expert_size)
    assert out.shape == (total_tokens, output_size)
    assert jnp.allclose(out, ref, atol=1e-4, rtol=1e-4), "mismatch vs reference"

    print("KERNEL_OK")
</pallas_src>

<mosaic_0001>
module attributes {stable_mosaic.version = 11 : i64} {
  func.func @_bitlinear_tile_kernel(%arg0: i32, %arg1: i32, %arg2: memref<6xi32, #tpu.memory_space<smem>>, %arg3: memref<128x256xf32, #tpu.memory_space<vmem>>, %arg4: memref<1x256x256xbf16, #tpu.memory_space<vmem>>, %arg5: memref<6xf32, #tpu.memory_space<smem>>, %arg6: memref<128x256xf32, #tpu.memory_space<vmem>>) attributes {dimension_semantics = [#tpu.dimension_semantics<parallel>, #tpu.dimension_semantics<parallel>], iteration_bounds = array<i64: 1, 6>, scalar_prefetch = 1 : i64, scratch_operands = 0 : i64, tpu.core_type = #tpu.core_type<tc>, window_params = [{transform_indices = @transform_0, window_bounds = array<i64: 128, 256>}, {transform_indices = @transform_1, window_bounds = array<i64: 1, 256, 256>}, {transform_indices = @transform_2, window_bounds = array<i64: 6>}, {transform_indices = @transform_3, window_bounds = array<i64: 128, 256>}]} {
    %c0 = arith.constant 0 : index
    %c0_0 = arith.constant 0 : index
    %0 = vector.load %arg3[%c0, %c0_0] : memref<128x256xf32, #tpu.memory_space<vmem>>, vector<128x256xf32>
    %1 = math.absf %0 : vector<128x256xf32>
    %cst = arith.constant dense<0xFF800000> : vector<128xf32>
    %2 = vector.multi_reduction <maximumf>, %1, %cst [1] : vector<128x256xf32> to vector<128xf32>
    %3 = vector.shape_cast %2 : vector<128xf32> to vector<128x1xf32>
    %cst_1 = arith.constant 9.99999974E-6 : f32
    %4 = vector.broadcast %cst_1 : f32 to vector<128x1xf32>
    %5 = arith.maximumf %3, %4 : vector<128x1xf32>
    %cst_2 = arith.constant 1.270000e+02 : f32
    %6 = vector.broadcast %cst_2 : f32 to vector<128x1xf32>
    %7 = arith.divf %6, %5 : vector<128x1xf32>
    %8 = vector.broadcast %7 : vector<128x1xf32> to vector<128x256xf32>
    %9 = arith.mulf %0, %8 : vector<128x256xf32>
    %10 = math.roundeven %9 : vector<128x256xf32>
    %cst_3 = arith.constant -1.280000e+02 : f32
    %cst_4 = arith.constant 1.270000e+02 : f32
    %11 = vector.broadcast %cst_3 : f32 to vector<128x256xf32>
    %12 = arith.maximumf %11, %10 : vector<128x256xf32>
    %13 = vector.broadcast %cst_4 : f32 to vector<128x256xf32>
    %14 = arith.minimumf %13, %12 : vector<128x256xf32>
    %15 = arith.truncf %14 : vector<128x256xf32> to vector<128x256xbf16>
    %c0_5 = arith.constant 0 : index
    %c0_6 = arith.constant 0 : index
    %c0_7 = arith.constant 0 : index
    %16 = vector.load %arg4[%c0_5, %c0_6, %c0_7] : memref<1x256x256xbf16, #tpu.memory_space<vmem>>, vector<1x256x256xbf16>
    %17 = vector.shape_cast %16 : vector<1x256x256xbf16> to vector<256x256xbf16>
    %cst_8 = arith.constant dense<0.000000e+00> : vector<128x256xf32>
    %18 = tpu.matmul %15, %17, %cst_8 {dimension_numbers = #tpu.dot_dimension_numbers<[1], [0], [0], [1], [0, 0, 1, 1], [], []>} : vector<128x256xbf16>, vector<256x256xbf16>, vector<128x256xf32> -> vector<128x256xf32>
    %19 = arith.index_cast %arg1 : i32 to index
    %20 = memref.load %arg5[%19] : memref<6xf32, #tpu.memory_space<smem>>
    %21 = vector.broadcast %20 : f32 to vector<128x1xf32>
    %22 = arith.mulf %5, %21 : vector<128x1xf32>
    %23 = vector.broadcast %22 : vector<128x1xf32> to vector<128x256xf32>
    %24 = arith.mulf %18, %23 : vector<128x256xf32>
    %c0_9 = arith.constant 0 : index
    %c0_10 = arith.constant 0 : index
    %25 = vector.load %arg6[%c0_9, %c0_10] : memref<128x256xf32, #tpu.memory_space<vmem>>, vector<128x256xf32>
    tpu.vector_store %arg6[%c0_9, %c0_10], %24 {strides = array<i32>} : memref<128x256xf32, #tpu.memory_space<vmem>>, vector<128x256xf32>,
    return
  }
  func.func @transform_0(%arg0: i32, %arg1: i32, %arg2: memref<6xi32, #tpu.memory_space<smem>>) -> (i32, i32) {
    %c0_i32 = arith.constant 0 : i32
    %c0_i32_0 = arith.constant 0 : i32
    return %arg1, %c0_i32 : i32, i32
  }
  func.func @transform_1(%arg0: i32, %arg1: i32, %arg2: memref<6xi32, #tpu.memory_space<smem>>) -> (i32, i32, i32) {
    %0 = arith.index_cast %arg1 : i32 to index
    %1 = memref.load %arg2[%0] : memref<6xi32, #tpu.memory_space<smem>>
    %c0_i32 = arith.constant 0 : i32
    %c0_i32_0 = arith.constant 0 : i32
    return %1, %c0_i32, %arg0 : i32, i32, i32
  }
  func.func @transform_2(%arg0: i32, %arg1: i32, %arg2: memref<6xi32, #tpu.memory_space<smem>>) -> i32 {
    %c0_i32 = arith.constant 0 : i32
    %c0_i32_0 = arith.constant 0 : i32
    return %c0_i32 : i32
  }
  func.func @transform_3(%arg0: i32, %arg1: i32, %arg2: memref<6xi32, #tpu.memory_space<smem>>) -> (i32, i32) {
    %c0_i32 = arith.constant 0 : i32
    return %arg1, %arg0 : i32, i32
  }
}

</mosaic_0001>

<llo_original>
// kernel: _forward.1
$region0: #{_forward.1}
  #allocation0 [shape = 'u32[]', space=smem, size = 0x4, offset = 0x4, fixed_abs, tag = 'smem constant byte address 0x4 - core index']
  #allocation1 [shape = 'u32[144,128]{1,0:T(1,128)}', space=vmem, size = 0x12000, scoped, tag = 'internal scratch']
  #allocation2 [shape = 's32[1]{0}', space=sflag, size = 0x4, scoped, tag = 'scoped memory for _forward.1']
  #allocation3 [shape = 'u8[512]{0}', space=smem, size = 0x200, scoped, tag = 'prefetched SMEM operand 0']
  %s0 = inlined_call_operand.vmem [shape: s32[6], index: 0, kind: input, shape index: {}]
  %s1 = inlined_call_operand.vmem [shape: f32[768,256], index: 1, kind: input, shape index: {}]
  %s2 = inlined_call_operand.vmem [shape: bf16[4,256,256], index: 2, kind: input, shape index: {}]
  %s3 = inlined_call_operand.vmem [shape: f32[6], index: 3, kind: input, shape index: {}]
  %s4 = inlined_call_operand.vmem [shape: f32[768,256], index: 4, kind: output, shape index: {}]
  %s5 = sld [smem:[#allocation0]]
  $region49: #{_forward.1} parent=0
    _
  %s7 = ssub.s32 1, %s5
  %s8 = scalar_select 0, %s7, %s5
  %s9 = sshll.u32 %s0, 4
  %s10 = int_to_ptr.vmem [resolvable:$true] %s9
  %12 = dma.vmem_to_smem %s10, 16, [#allocation3], [#allocation2]
  %13 = dma.done [#allocation2], 16
  %14 = sfence
  $region1: #{_forward.1} parent=0
    #allocation4 [shape = 'u8[512]{0}', space=smem, size = 0x200, scoped, tag = 'input window, operand 3, single buffered']
    #allocation5 [shape = 's32[2]{0}', space=sflag, size = 0x8, scoped, tag = 'scoped memory for _forward.1']
    %15 = vsyncpa [#allocation5], 0
    loop: start=0, step=1, limit=8
    $region2: #{_forward.1} parent=1 // loop_pre_header
      _
    $region3: #{_forward.1} parent=1 // loop_header
      %s17 = sphi 0, %s21
      %p18 = scmp.ge.s32.totalorder %s17, 8
      %s24 = sphi 0, %s36
      %s25 = sphi 0, %s32
      %s26 = sphi 0, %s24
      %s27 = sphi 0, %s25
      %s28 = sphi 0, %s26
      %s29 = sphi 0, %s27
      %s39 = sphi 0, %s41
      %s42 = sphi 0, %s39
      %s43 = sphi 0, %s42
      %s59 = sphi 0, %s43
      %s69 = sphi 0, %s71
      %s72 = sphi 0, %s69
      %s73 = sphi 0, %s72
      %s89 = sphi 0, %s73
      %s93 = sphi 0, %s93
      %s95 = sphi 0, %s93
      %s96 = sphi 0, %s95
      %s110 = sphi 0, %s96
      %s118 = sphi 0, %s120
      %s121 = sphi 0, %s118
      %s122 = sphi 0, %s121
      %s138 = sphi 0, %s122
    $region4: #{_forward.1} parent=1 // loop_header_branch
      %20 = sbr.rel (%p18) target = $region8
    $region5: #{_forward.1} parent=1 // loop_body
      %s22 = ssub.s32 %s17, 1
      %s23 = ssub.s32 %s17, 2
      %s30 = sadd.s32 1, %s25
      %p31 = scmp.ge.s32.totalorder %s30, 6
      %s32 = scalar_select %p31, 0, %s30
      %s33 = sadd.s32 1, %s24
      %s34 = scalar_select %p31, %s33, %s24
      %p35 = scmp.ge.s32.totalorder %s34, 1
      %s36 = scalar_select %p35, 0, %s34
      %s37 = ssub.s32 %s25, %s32
      %p38 = scmp.eq.s32.totalorder %s37, 0
      %s40 = sadd.s32 %s39, 1
      %s41 = scalar_select %p38, %s39, %s40
      %p44 = pneg %p38
      %p45 = scmp.eq.s32.totalorder %s17, 5
      %p46 = por %p44, %p45
      %p47 = scmp.ne.s32.totalorder %s39, %s42
      %p48 = scmp.eq.s32.totalorder %s17, 0
      %p49 = por %p47, %p48
      %p50 = scmp.ne.s32.totalorder %s39, %s42
      %p51 = scmp.eq.s32.totalorder %s22, 5
      %p52 = por %p50, %p51
      %p53 = scmp.ne.s32.totalorder %s42, %s43
      %p54 = scmp.eq.s32.totalorder %s22, 0
      %p55 = por %p53, %p54
      %p56 = scmp.ne.s32.totalorder %s42, %s43
      %p57 = scmp.eq.s32.totalorder %s23, 5
      %p58 = por %p56, %p57
      %p60 = scmp.ne.s32.totalorder %s43, %s59
      %p61 = scmp.eq.s32.totalorder %s23, 0
      %p62 = por %p60, %p61
      %s63 = sld [smem:[#allocation3 + %s25]]
      %s64 = sld [smem:[#allocation3 + %s32]]
      %s65 = ssub.s32 %s63, %s64
      %s66 = ssub.s32 %s24, %s36
      %s67 = sor.u32 %s65, %s66
      %p68 = scmp.eq.s32.totalorder %s67, 0
      %s70 = sadd.s32 %s69, 1
      %s71 = scalar_select %p68, %s69, %s70
      %p74 = pneg %p68
      %p75 = scmp.eq.s32.totalorder %s17, 5
      %p76 = por %p74, %p75
      %p77 = scmp.ne.s32.totalorder %s69, %s72
      %p78 = scmp.eq.s32.totalorder %s17, 0
      %p79 = por %p77, %p78
      %p80 = scmp.ne.s32.totalorder %s69, %s72
      %p81 = scmp.eq.s32.totalorder %s22, 5
      %p82 = por %p80, %p81
      %p83 = scmp.ne.s32.totalorder %s72, %s73
      %p84 = scmp.eq.s32.totalorder %s22, 0
      %p85 = por %p83, %p84
      %p86 = scmp.ne.s32.totalorder %s72, %s73
      %p87 = scmp.eq.s32.totalorder %s23, 5
      %p88 = por %p86, %p87
      %p90 = scmp.ne.s32.totalorder %s73, %s89
      %p91 = scmp.eq.s32.totalorder %s23, 0
      %p92 = por %p90, %p91
      %s94 = sadd.s32 %s93, 1
      %p97 = scmp.eq.s32.totalorder %s17, 5
      %p98 = scmp.ne.s32.totalorder %s93, %s95
      %p99 = scmp.eq.s32.totalorder %s17, 0
      %p100 = por %p98, %p99
      %p101 = scmp.ne.s32.totalorder %s93, %s95
      %p102 = scmp.eq.s32.totalorder %s22, 5
      %p103 = por %p101, %p102
      %p104 = scmp.ne.s32.totalorder %s95, %s96
      %p105 = scmp.eq.s32.totalorder %s22, 0
      %p106 = por %p104, %p105
      %p107 = scmp.ne.s32.totalorder %s95, %s96
      %p108 = scmp.eq.s32.totalorder %s23, 5
      %p109 = por %p107, %p108
      %p111 = scmp.ne.s32.totalorder %s96, %s110
      %p112 = scmp.eq.s32.totalorder %s23, 0
      %p113 = por %p111, %p112
      %s114 = ssub.s32 %s25, %s32
      %s115 = ssub.s32 %s24, %s36
      %s116 = sor.u32 %s114, %s115
      %p117 = scmp.eq.s32.totalorder %s116, 0
      %s119 = sadd.s32 %s118, 1
      %s120 = scalar_select %p117, %s118, %s119
      %p123 = pneg %p117
      %p124 = scmp.eq.s32.totalorder %s17, 5
      %p125 = por %p123, %p124
      %p126 = scmp.ne.s32.totalorder %s118, %s121
      %p127 = scmp.eq.s32.totalorder %s17, 0
      %p128 = por %p126, %p127
      %p129 = scmp.ne.s32.totalorder %s118, %s121
      %p130 = scmp.eq.s32.totalorder %s22, 5
      %p131 = por %p129, %p130
      %p132 = scmp.ne.s32.totalorder %s121, %s122
      %p133 = scmp.eq.s32.totalorder %s22, 0
      %p134 = por %p132, %p133
      %p135 = scmp.ne.s32.totalorder %s121, %s122
      %p136 = scmp.eq.s32.totalorder %s23, 5
      %p137 = por %p135, %p136
      %p139 = scmp.ne.s32.totalorder %s122, %s138
      %p140 = scmp.eq.s32.totalorder %s23, 0
      %p141 = por %p139, %p140
      %p142 = scmp.le.s32.totalorder 1, %s17
      %p143 = scmp.lt.s32.totalorder %s17, 7
      %p144 = pnand %p142, %p143
      %p145 = pneg %p144
      // Predicated region
      $region9: #{_forward.1} parent=5 // pred_check
        _
      $region10: #{_forward.1} parent=5 // pred_check_branch
        %147 = sbr.rel (%p144) target = $region12
      $region11: #{_forward.1} parent=5 // pred_region
        %s148 = ssub.s32 %s17, 1
        // Predicated region
        $region13: #{_forward.1} parent=11 // pred_check
          %p149 = pneg %p106
        $region14: #{_forward.1} parent=11 // pred_check_branch
          %151 = sbr.rel (%p149) target = $region16
        $region15: #{_forward.1} parent=11 // pred_region
          %s153 = ssub.s32 16, 16
          %154 = vsyncadd [#allocation5], %s153
          %s156 = sshll.u32 %s3, 4
          %s157 = int_to_ptr.vmem [resolvable:$true] %s156
          %159 = dma.vmem_to_smem %s157, 16, [#allocation4], [#allocation5]
        $region16: #{_forward.1} parent=11 // pred_fallthru
          _
      $region12: #{_forward.1} parent=5 // pred_fallthru
        _
      %p160 = scmp.lt.s32.totalorder %s17, 6
      // Predicated region
      $region17: #{_forward.1} parent=5 // pred_check
        %p161 = pneg %p160
      $region18: #{_forward.1} parent=5 // pred_check_branch
        %163 = sbr.rel (%p161) target = $region20
      $region19: #{_forward.1} parent=5 // pred_region
        // Predicated region
        $region21: #{_forward.1} parent=19 // pred_check
          %p164 = pneg %p49
        $region22: #{_forward.1} parent=19 // pred_check_branch
          %166 = sbr.rel (%p164) target = $region24
        $region23: #{_forward.1} parent=19 // pred_region
          %s167 = smul.u32 16, %s25
          %p168 = scmp.lt.s32.totalorder %s167, 95
          %s169 = scalar_select %p168, %s167, 95
          %s170 = smul.addr %s169, 2
          %s171 = smul.addr %s170, 8
          %s172 = scalar_lea.vmem %s1, %s171
          %s173 = smul.u32 16, %s25
        $region24: #{_forward.1} parent=19 // pred_fallthru
          _
        // Predicated region
        $region25: #{_forward.1} parent=19 // pred_check
          %p174 = pneg %p79
        $region26: #{_forward.1} parent=19 // pred_check_branch
          %176 = sbr.rel (%p174) target = $region28
        $region27: #{_forward.1} parent=19 // pred_region
          %s177 = sld [smem:[#allocation3 + %s25]]
          %s178 = smul.u32 2, %s24
          %p179 = scmp.lt.s32.totalorder %s177, 3
          %s180 = scalar_select %p179, %s177, 3
          %p181 = scmp.lt.s32.totalorder %s178, 1
          %s182 = scalar_select %p181, %s178, 1
          %s183 = smul.addr %s180, 64
          %s184 = sadd.s32 %s182, %s183
          %s185 = smul.addr %s184, 4
          %s186 = scalar_lea.vmem %s2, %s185
          %s187 = sld [smem:[#allocation3 + %s25]]
          %s188 = smul.u32 2, %s24
        $region28: #{_forward.1} parent=19 // pred_fallthru
          _
      $region20: #{_forward.1} parent=5 // pred_fallthru
        _
      %p189 = scmp.le.s32.totalorder 1, %s17
      %p190 = scmp.lt.s32.totalorder %s17, 7
      %p191 = pnand %p189, %p190
      %p192 = pneg %p191
      // Predicated region
      $region29: #{_forward.1} parent=5 // pred_check
        _
      $region30: #{_forward.1} parent=5 // pred_check_branch
        %194 = sbr.rel (%p191) target = $region32
      $region31: #{_forward.1} parent=5 // pred_region
        %s195 = ssub.s32 %s17, 1
        // Predicated region
        $region33: #{_forward.1} parent=31 // pred_check
          %p196 = pneg %p106
        $region34: #{_forward.1} parent=31 // pred_check_branch
          %198 = sbr.rel (%p196) target = $region36
        $region35: #{_forward.1} parent=31 // pred_region
          %199 = dma.done [#allocation5], 16
        $region36: #{_forward.1} parent=31 // pred_fallthru
          _
        %200 = sfence
        %s201 = smul.u32 16, %s27
        %p202 = scmp.lt.s32.totalorder %s201, 95
        %s203 = scalar_select %p202, %s201, 95
        %s204 = smul.addr %s203, 2
        %s205 = smul.addr %s204, 8
        %s206 = scalar_lea.vmem %s1, %s205
        %p207 = pneg %p55
        %p208 = pneg %p52
        %s209 = sld [smem:[#allocation3 + %s27]]
        %s210 = smul.u32 2, %s26
        %p211 = scmp.lt.s32.totalorder %s209, 3
        %s212 = scalar_select %p211, %s209, 3
        %p213 = scmp.lt.s32.totalorder %s210, 1
        %s214 = scalar_select %p213, %s210, 1
        %s215 = smul.addr %s212, 64
        %s216 = sadd.s32 %s214, %s215
        %s217 = smul.addr %s216, 4
        %s218 = scalar_lea.vmem %s2, %s217
        %p219 = pneg %p85
        %p220 = pneg %p82
        %p221 = pneg %p106
        %p222 = pneg %p103
        %p223 = pneg %p134
        %p224 = pneg %p131
        %s225 = smul.u32 16, %s27
        %s226 = smul.u32 2, %s26
        %p227 = scmp.lt.s32.totalorder %s225, 95
        %s228 = scalar_select %p227, %s225, 95
        %p229 = scmp.lt.s32.totalorder %s226, 1
        %s230 = scalar_select %p229, %s226, 1
        %s231 = smul.addr %s228, 2
        %s232 = sadd.s32 %s230, %s231
        %s233 = smul.addr %s232, 8
        %s234 = scalar_lea.vmem %s4, %s233
        %s235 = smul.u32 16, %s27
        %p236 = scmp.lt.s32.totalorder %s235, 95
        %s237 = scalar_select %p236, %s235, 95
        %s238 = smul.addr %s237, 2
        %s239 = smul.addr %s238, 8
        %s240 = scalar_lea.vmem %s1, %s239
        %s241 = smul.u32 16, %s27
        %s242 = sld [smem:[#allocation3 + %s27]]
        %s243 = smul.u32 2, %s26
        %p244 = scmp.lt.s32.totalorder %s242, 3
        %s245 = scalar_select %p244, %s242, 3
        %p246 = scmp.lt.s32.totalorder %s243, 1
        %s247 = scalar_select %p246, %s243, 1
        %s248 = smul.addr %s245, 64
        %s249 = sadd.s32 %s247, %s248
        %s250 = smul.addr %s249, 4
        %s251 = scalar_lea.vmem %s2, %s250
        %s252 = sld [smem:[#allocation3 + %s27]]
        %s253 = smul.u32 2, %s26
        %s254 = smul.u32 16, %s27
        %s255 = smul.u32 2, %s26
        %p256 = scmp.lt.s32.totalorder %s254, 95
        %s257 = scalar_select %p256, %s254, 95
        %p258 = scmp.lt.s32.totalorder %s255, 1
        %s259 = scalar_select %p258, %s255, 1
        %s260 = smul.addr %s257, 2
        %s261 = sadd.s32 %s259, %s260
        %s262 = smul.addr %s261, 8
        %s263 = scalar_lea.vmem %s4, %s262
        %s264 = smul.u32 16, %s27
        %s265 = smul.u32 2, %s26
        %v266 = vld [vmem:[%s240] sm:$0xff]
        %v267 = vld [vmem:[%s240 + $0x8] sm:$0xff]
        %v268 = vld [vmem:[%s240 + $0x10] sm:$0xff]
        %v269 = vld [vmem:[%s240 + $0x18] sm:$0xff]
        %v270 = vld [vmem:[%s240 + $0x20] sm:$0xff]
        %v271 = vld [vmem:[%s240 + $0x28] sm:$0xff]
        %v272 = vld [vmem:[%s240 + $0x30] sm:$0xff]
        %v273 = vld [vmem:[%s240 + $0x38] sm:$0xff]
        %v274 = vld [vmem:[%s240 + $0x40] sm:$0xff]
        %v275 = vld [vmem:[%s240 + $0x48] sm:$0xff]
        %v276 = vld [vmem:[%s240 + $0x50] sm:$0xff]
        %v277 = vld [vmem:[%s240 + $0x58] sm:$0xff]
        %v278 = vld [vmem:[%s240 + $0x60] sm:$0xff]
        %v279 = vld [vmem:[%s240 + $0x68] sm:$0xff]
        %v280 = vld [vmem:[%s240 + $0x70] sm:$0xff]
        %v281 = vld [vmem:[%s240 + $0x78] sm:$0xff]
        %v282 = vld [vmem:[%s240 + $0x80] sm:$0xff]
        %v283 = vld [vmem:[%s240 + $0x88] sm:$0xff]
        %v284 = vld [vmem:[%s240 + $0x90] sm:$0xff]
        %v285 = vld [vmem:[%s240 + $0x98] sm:$0xff]
        %v286 = vld [vmem:[%s240 + $0xa0] sm:$0xff]
        %v287 = vld [vmem:[%s240 + $0xa8] sm:$0xff]
        %v288 = vld [vmem:[%s240 + $0xb0] sm:$0xff]
        %v289 = vld [vmem:[%s240 + $0xb8] sm:$0xff]
        %v290 = vld [vmem:[%s240 + $0xc0] sm:$0xff]
        %v291 = vld [vmem:[%s240 + $0xc8] sm:$0xff]
        %v292 = vld [vmem:[%s240 + $0xd0] sm:$0xff]
        %v293 = vld [vmem:[%s240 + $0xd8] sm:$0xff]
        %v294 = vld [vmem:[%s240 + $0xe0] sm:$0xff]
        %v295 = vld [vmem:[%s240 + $0xe8] sm:$0xff]
        %v296 = vld [vmem:[%s240 + $0xf0] sm:$0xff]
        %v297 = vld [vmem:[%s240 + $0xf8] sm:$0xff]
        %v298 = vand.u32 2147483647, %v266
        %v299 = vand.u32 2147483647, %v267
        %v300 = vand.u32 2147483647, %v268
        %v301 = vand.u32 2147483647, %v269
        %v302 = vand.u32 2147483647, %v270
        %v303 = vand.u32 2147483647, %v271
        %v304 = vand.u32 2147483647, %v272
        %v305 = vand.u32 2147483647, %v273
        %v306 = vand.u32 2147483647, %v274
        %v307 = vand.u32 2147483647, %v275
        %v308 = vand.u32 2147483647, %v276
        %v309 = vand.u32 2147483647, %v277
        %v310 = vand.u32 2147483647, %v278
        %v311 = vand.u32 2147483647, %v279
        %v312 = vand.u32 2147483647, %v280
        %v313 = vand.u32 2147483647, %v281
        %v314 = vand.u32 2147483647, %v282
        %v315 = vand.u32 2147483647, %v283
        %v316 = vand.u32 2147483647, %v284
        %v317 = vand.u32 2147483647, %v285
        %v318 = vand.u32 2147483647, %v286
        %v319 = vand.u32 2147483647, %v287
        %v320 = vand.u32 2147483647, %v288
        %v321 = vand.u32 2147483647, %v289
        %v322 = vand.u32 2147483647, %v290
        %v323 = vand.u32 2147483647, %v291
        %v324 = vand.u32 2147483647, %v292
        %v325 = vand.u32 2147483647, %v293
        %v326 = vand.u32 2147483647, %v294
        %v327 = vand.u32 2147483647, %v295
        %v328 = vand.u32 2147483647, %v296
        %v329 = vand.u32 2147483647, %v297
        %v330 = vmax.f32 %v298, %v299
        %331 = vmax.xlane.f32.xlu0 %v330
        %v332 = vpop.xlane.xlu0 %331
        %v333 = vmax.f32 %v300, %v301
        %334 = vmax.xlane.f32.xlu0 %v333
        %v335 = vpop.xlane.xlu0 %334
        %v336 = vmax.f32 %v302, %v303
        %337 = vmax.xlane.f32.xlu0 %v336
        %v338 = vpop.xlane.xlu0 %337
        %v339 = vmax.f32 %v304, %v305
        %340 = vmax.xlane.f32.xlu0 %v339
        %v341 = vpop.xlane.xlu0 %340
        %v342 = vmax.f32 %v306, %v307
        %343 = vmax.xlane.f32.xlu0 %v342
        %v344 = vpop.xlane.xlu0 %343
        %v345 = vmax.f32 %v308, %v309
        %346 = vmax.xlane.f32.xlu0 %v345
        %v347 = vpop.xlane.xlu0 %346
        %v348 = vmax.f32 %v310, %v311
        %349 = vmax.xlane.f32.xlu0 %v348
        %v350 = vpop.xlane.xlu0 %349
        %v351 = vmax.f32 %v312, %v313
        %352 = vmax.xlane.f32.xlu0 %v351
        %v353 = vpop.xlane.xlu0 %352
        %v354 = vmax.f32 %v314, %v315
        %355 = vmax.xlane.f32.xlu0 %v354
        %v356 = vpop.xlane.xlu0 %355
        %v357 = vmax.f32 %v316, %v317
        %358 = vmax.xlane.f32.xlu0 %v357
        %v359 = vpop.xlane.xlu0 %358
        %v360 = vmax.f32 %v318, %v319
        %361 = vmax.xlane.f32.xlu0 %v360
        %v362 = vpop.xlane.xlu0 %361
        %v363 = vmax.f32 %v320, %v321
        %364 = vmax.xlane.f32.xlu0 %v363
        %v365 = vpop.xlane.xlu0 %364
        %v366 = vmax.f32 %v322, %v323
        %367 = vmax.xlane.f32.xlu0 %v366
        %v368 = vpop.xlane.xlu0 %367
        %v369 = vmax.f32 %v324, %v325
        %370 = vmax.xlane.f32.xlu0 %v369
        %v371 = vpop.xlane.xlu0 %370
        %v372 = vmax.f32 %v326, %v327
        %373 = vmax.xlane.f32.xlu0 %v372
        %v374 = vpop.xlane.xlu0 %373
        %v375 = vmax.f32 %v328, %v329
        %376 = vmax.xlane.f32.xlu0 %v375
        %v377 = vpop.xlane.xlu0 %376
        %v378 = vmax.f32 %v332, 1e-05
        %v379 = vmax.f32 %v335, 1e-05
        %v380 = vmax.f32 %v338, 1e-05
        %v381 = vmax.f32 %v341, 1e-05
        %v382 = vmax.f32 %v344, 1e-05
        %v383 = vmax.f32 %v347, 1e-05
        %v384 = vmax.f32 %v350, 1e-05
        %v385 = vmax.f32 %v353, 1e-05
        %v386 = vmax.f32 %v356, 1e-05
        %v387 = vmax.f32 %v359, 1e-05
        %v388 = vmax.f32 %v362, 1e-05
        %v389 = vmax.f32 %v365, 1e-05
        %v390 = vmax.f32 %v368, 1e-05
        %v391 = vmax.f32 %v371, 1e-05
        %v392 = vmax.f32 %v374, 1e-05
        %v393 = vmax.f32 %v377, 1e-05
        %v394 = vrcp.pop %v378
        %v395 = vmul.f32 127.0, %v394
        %v396 = vrcp.pop %v379
        %v397 = vmul.f32 127.0, %v396
        %v398 = vrcp.pop %v380
        %v399 = vmul.f32 127.0, %v398
        %v400 = vrcp.pop %v381
        %v401 = vmul.f32 127.0, %v400
        %v402 = vrcp.pop %v382
        %v403 = vmul.f32 127.0, %v402
        %v404 = vrcp.pop %v383
        %v405 = vmul.f32 127.0, %v404
        %v406 = vrcp.pop %v384
        %v407 = vmul.f32 127.0, %v406
        %v408 = vrcp.pop %v385
        %v409 = vmul.f32 127.0, %v408
        %v410 = vrcp.pop %v386
        %v411 = vmul.f32 127.0, %v410
        %v412 = vrcp.pop %v387
        %v413 = vmul.f32 127.0, %v412
        %v414 = vrcp.pop %v388
        %v415 = vmul.f32 127.0, %v414
        %v416 = vrcp.pop %v389
        %v417 = vmul.f32 127.0, %v416
        %v418 = vrcp.pop %v390
        %v419 = vmul.f32 127.0, %v418
        %v420 = vrcp.pop %v391
        %v421 = vmul.f32 127.0, %v420
        %v422 = vrcp.pop %v392
        %v423 = vmul.f32 127.0, %v422
        %v424 = vrcp.pop %v393
        %v425 = vmul.f32 127.0, %v424
        %v426 = vmul.f32 %v266, %v395
        %v427 = vmul.f32 %v267, %v395
        %v428 = vmul.f32 %v268, %v397
        %v429 = vmul.f32 %v269, %v397
        %v430 = vmul.f32 %v270, %v399
        %v431 = vmul.f32 %v271, %v399
        %v432 = vmul.f32 %v272, %v401
        %v433 = vmul.f32 %v273, %v401
        %v434 = vmul.f32 %v274, %v403
        %v435 = vmul.f32 %v275, %v403
        %v436 = vmul.f32 %v276, %v405
        %v437 = vmul.f32 %v277, %v405
        %v438 = vmul.f32 %v278, %v407
        %v439 = vmul.f32 %v279, %v407
        %v440 = vmul.f32 %v280, %v409
        %v441 = vmul.f32 %v281, %v409
        %v442 = vmul.f32 %v282, %v411
        %v443 = vmul.f32 %v283, %v411
        %v444 = vmul.f32 %v284, %v413
        %v445 = vmul.f32 %v285, %v413
        %v446 = vmul.f32 %v286, %v415
        %v447 = vmul.f32 %v287, %v415
        %v448 = vmul.f32 %v288, %v417
        %v449 = vmul.f32 %v289, %v417
        %v450 = vmul.f32 %v290, %v419
        %v451 = vmul.f32 %v291, %v419
        %v452 = vmul.f32 %v292, %v421
        %v453 = vmul.f32 %v293, %v421
        %v454 = vmul.f32 %v294, %v423
        %v455 = vmul.f32 %v295, %v423
        %v456 = vmul.f32 %v296, %v425
        %v457 = vmul.f32 %v297, %v425
        %v458 = vround.ne.pseudo %v426
        %v459 = vround.ne.pseudo %v427
        %v460 = vround.ne.pseudo %v428
        %v461 = vround.ne.pseudo %v429
        %v462 = vround.ne.pseudo %v430
        %v463 = vround.ne.pseudo %v431
        %v464 = vround.ne.pseudo %v432
        %v465 = vround.ne.pseudo %v433
        %v466 = vround.ne.pseudo %v434
        %v467 = vround.ne.pseudo %v435
        %v468 = vround.ne.pseudo %v436
        %v469 = vround.ne.pseudo %v437
        %v470 = vround.ne.pseudo %v438
        %v471 = vround.ne.pseudo %v439
        %v472 = vround.ne.pseudo %v440
        %v473 = vround.ne.pseudo %v441
        %v474 = vround.ne.pseudo %v442
        %v475 = vround.ne.pseudo %v443
        %v476 = vround.ne.pseudo %v444
        %v477 = vround.ne.pseudo %v445
        %v478 = vround.ne.pseudo %v446
        %v479 = vround.ne.pseudo %v447
        %v480 = vround.ne.pseudo %v448
        %v481 = vround.ne.pseudo %v449
        %v482 = vround.ne.pseudo %v450
        %v483 = vround.ne.pseudo %v451
        %v484 = vround.ne.pseudo %v452
        %v485 = vround.ne.pseudo %v453
        %v486 = vround.ne.pseudo %v454
        %v487 = vround.ne.pseudo %v455
        %v488 = vround.ne.pseudo %v456
        %v489 = vround.ne.pseudo %v457
        %v490 = vmax.f32 %v458, -128.0
        %v491 = vmax.f32 %v459, -128.0
        %v492 = vmax.f32 %v460, -128.0
        %v493 = vmax.f32 %v461, -128.0
        %v494 = vmax.f32 %v462, -128.0
        %v495 = vmax.f32 %v463, -128.0
        %v496 = vmax.f32 %v464, -128.0
        %v497 = vmax.f32 %v465, -128.0
        %v498 = vmax.f32 %v466, -128.0
        %v499 = vmax.f32 %v467, -128.0
        %v500 = vmax.f32 %v468, -128.0
        %v501 = vmax.f32 %v469, -128.0
        %v502 = vmax.f32 %v470, -128.0
        %v503 = vmax.f32 %v471, -128.0
        %v504 = vmax.f32 %v472, -128.0
        %v505 = vmax.f32 %v473, -128.0
        %v506 = vmax.f32 %v474, -128.0
        %v507 = vmax.f32 %v475, -128.0
        %v508 = vmax.f32 %v476, -128.0
        %v509 = vmax.f32 %v477, -128.0
        %v510 = vmax.f32 %v478, -128.0
        %v511 = vmax.f32 %v479, -128.0
        %v512 = vmax.f32 %v480, -128.0
        %v513 = vmax.f32 %v481, -128.0
        %v514 = vmax.f32 %v482, -128.0
        %v515 = vmax.f32 %v483, -128.0
        %v516 = vmax.f32 %v484, -128.0
        %v517 = vmax.f32 %v485, -128.0
        %v518 = vmax.f32 %v486, -128.0
        %v519 = vmax.f32 %v487, -128.0
        %v520 = vmax.f32 %v488, -128.0
        %v521 = vmax.f32 %v489, -128.0
        %v522 = vmin.f32 %v490, 127.0
        %v523 = vmin.f32 %v491, 127.0
        %v524 = vmin.f32 %v492, 127.0
        %v525 = vmin.f32 %v493, 127.0
        %v526 = vmin.f32 %v494, 127.0
        %v527 = vmin.f32 %v495, 127.0
        %v528 = vmin.f32 %v496, 127.0
        %v529 = vmin.f32 %v497, 127.0
        %v530 = vmin.f32 %v498, 127.0
        %v531 = vmin.f32 %v499, 127.0
        %v532 = vmin.f32 %v500, 127.0
        %v533 = vmin.f32 %v501, 127.0
        %v534 = vmin.f32 %v502, 127.0
        %v535 = vmin.f32 %v503, 127.0
        %v536 = vmin.f32 %v504, 127.0
        %v537 = vmin.f32 %v505, 127.0
        %v538 = vmin.f32 %v506, 127.0
        %v539 = vmin.f32 %v507, 127.0
        %v540 = vmin.f32 %v508, 127.0
        %v541 = vmin.f32 %v509, 127.0
        %v542 = vmin.f32 %v510, 127.0
        %v543 = vmin.f32 %v511, 127.0
        %v544 = vmin.f32 %v512, 127.0
        %v545 = vmin.f32 %v513, 127.0
        %v546 = vmin.f32 %v514, 127.0
        %v547 = vmin.f32 %v515, 127.0
        %v548 = vmin.f32 %v516, 127.0
        %v549 = vmin.f32 %v517, 127.0
        %v550 = vmin.f32 %v518, 127.0
        %v551 = vmin.f32 %v519, 127.0
        %v552 = vmin.f32 %v520, 127.0
        %v553 = vmin.f32 %v521, 127.0
        %v554 = vpack.c.bf16 %v524, %v522
        %v555 = vpack.c.bf16 %v525, %v523
        %v556 = vpack.c.bf16 %v528, %v526
        %v557 = vpack.c.bf16 %v529, %v527
        %v558 = vpack.c.bf16 %v532, %v530
        %v559 = vpack.c.bf16 %v533, %v531
        %v560 = vpack.c.bf16 %v536, %v534
        %v561 = vpack.c.bf16 %v537, %v535
        %v562 = vpack.c.bf16 %v540, %v538
        %v563 = vpack.c.bf16 %v541, %v539
        %v564 = vpack.c.bf16 %v544, %v542
        %v565 = vpack.c.bf16 %v545, %v543
        %v566 = vpack.c.bf16 %v548, %v546
        %v567 = vpack.c.bf16 %v549, %v547
        %v568 = vpack.c.bf16 %v552, %v550
        %v569 = vpack.c.bf16 %v553, %v551
        %v570 = vld [vmem:[%s251] sm:$0xff]
        %v571 = vld [vmem:[%s251 + $0x8] sm:$0xff]
        %v572 = vld [vmem:[%s251 + $0x10] sm:$0xff]
        %v573 = vld [vmem:[%s251 + $0x18] sm:$0xff]
        %v574 = vld [vmem:[%s251 + $0x20] sm:$0xff]
        %v575 = vld [vmem:[%s251 + $0x28] sm:$0xff]
        %v576 = vld [vmem:[%s251 + $0x30] sm:$0xff]
        %v577 = vld [vmem:[%s251 + $0x38] sm:$0xff]
        %v578 = vld [vmem:[%s251 + $0x40] sm:$0xff]
        %v579 = vld [vmem:[%s251 + $0x48] sm:$0xff]
        %v580 = vld [vmem:[%s251 + $0x50] sm:$0xff]
        %v581 = vld [vmem:[%s251 + $0x58] sm:$0xff]
        %v582 = vld [vmem:[%s251 + $0x60] sm:$0xff]
        %v583 = vld [vmem:[%s251 + $0x68] sm:$0xff]
        %v584 = vld [vmem:[%s251 + $0x70] sm:$0xff]
        %v585 = vld [vmem:[%s251 + $0x78] sm:$0xff]
        %v586 = vld [vmem:[%s251 + $0x80] sm:$0xff]
        %v587 = vld [vmem:[%s251 + $0x88] sm:$0xff]
        %v588 = vld [vmem:[%s251 + $0x90] sm:$0xff]
        %v589 = vld [vmem:[%s251 + $0x98] sm:$0xff]
        %v590 = vld [vmem:[%s251 + $0xa0] sm:$0xff]
        %v591 = vld [vmem:[%s251 + $0xa8] sm:$0xff]
        %v592 = vld [vmem:[%s251 + $0xb0] sm:$0xff]
        %v593 = vld [vmem:[%s251 + $0xb8] sm:$0xff]
        %v594 = vld [vmem:[%s251 + $0xc0] sm:$0xff]
        %v595 = vld [vmem:[%s251 + $0xc8] sm:$0xff]
        %v596 = vld [vmem:[%s251 + $0xd0] sm:$0xff]
        %v597 = vld [vmem:[%s251 + $0xd8] sm:$0xff]
        %v598 = vld [vmem:[%s251 + $0xe0] sm:$0xff]
        %v599 = vld [vmem:[%s251 + $0xe8] sm:$0xff]
        %v600 = vld [vmem:[%s251 + $0xf0] sm:$0xff]
        %v601 = vld [vmem:[%s251 + $0xf8] sm:$0xff]
        %v634 = vunpack.c.l.b16 %v570
        %v635 = vunpack.c.h.b16 %v570
        %v636 = vunpack.c.l.b16 %v571
        %v637 = vunpack.c.h.b16 %v571
        %v638 = vunpack.c.l.b16 %v572
        %v639 = vunpack.c.h.b16 %v572
        %v640 = vunpack.c.l.b16 %v573
        %v641 = vunpack.c.h.b16 %v573
        %v642 = vunpack.c.l.b16 %v574
        %v643 = vunpack.c.h.b16 %v574
        %v644 = vunpack.c.l.b16 %v575
        %v645 = vunpack.c.h.b16 %v575
        %v646 = vunpack.c.l.b16 %v576
        %v647 = vunpack.c.h.b16 %v576
        %v648 = vunpack.c.l.b16 %v577
        %v649 = vunpack.c.h.b16 %v577
        %v650 = vunpack.c.l.b16 %v578
        %v651 = vunpack.c.h.b16 %v578
        %v652 = vunpack.c.l.b16 %v579
        %v653 = vunpack.c.h.b16 %v579
        %v654 = vunpack.c.l.b16 %v580
        %v655 = vunpack.c.h.b16 %v580
        %v656 = vunpack.c.l.b16 %v581
        %v657 = vunpack.c.h.b16 %v581
        %v658 = vunpack.c.l.b16 %v582
        %v659 = vunpack.c.h.b16 %v582
        %v660 = vunpack.c.l.b16 %v583
        %v661 = vunpack.c.h.b16 %v583
        %v662 = vunpack.c.l.b16 %v584
        %v663 = vunpack.c.h.b16 %v584
        %v664 = vunpack.c.l.b16 %v585
        %v665 = vunpack.c.h.b16 %v585
        %v666 = vunpack.c.l.b16 %v586
        %v667 = vunpack.c.h.b16 %v586
        %v668 = vunpack.c.l.b16 %v587
        %v669 = vunpack.c.h.b16 %v587
        %v670 = vunpack.c.l.b16 %v588
        %v671 = vunpack.c.h.b16 %v588
        %v672 = vunpack.c.l.b16 %v589
        %v673 = vunpack.c.h.b16 %v589
        %v674 = vunpack.c.l.b16 %v590
        %v675 = vunpack.c.h.b16 %v590
        %v676 = vunpack.c.l.b16 %v591
        %v677 = vunpack.c.h.b16 %v591
        %v678 = vunpack.c.l.b16 %v592
        %v679 = vunpack.c.h.b16 %v592
        %v680 = vunpack.c.l.b16 %v593
        %v681 = vunpack.c.h.b16 %v593
        %v682 = vunpack.c.l.b16 %v594
        %v683 = vunpack.c.h.b16 %v594
        %v684 = vunpack.c.l.b16 %v595
        %v685 = vunpack.c.h.b16 %v595
        %v686 = vunpack.c.l.b16 %v596
        %v687 = vunpack.c.h.b16 %v596
        %v688 = vunpack.c.l.b16 %v597
        %v689 = vunpack.c.h.b16 %v597
        %v690 = vunpack.c.l.b16 %v598
        %v691 = vunpack.c.h.b16 %v598
        %v692 = vunpack.c.l.b16 %v599
        %v693 = vunpack.c.h.b16 %v599
        %v694 = vunpack.c.l.b16 %v600
        %v695 = vunpack.c.h.b16 %v600
        %v696 = vunpack.c.l.b16 %v601
        %v697 = vunpack.c.h.b16 %v601
        %v698 = vpack.c.b16 %v636, %v634
        %v699 = vpack.c.b16 %v637, %v635
        %v700 = vpack.c.b16 %v640, %v638
        %v701 = vpack.c.b16 %v641, %v639
        %v702 = vpack.c.b16 %v644, %v642
        %v703 = vpack.c.b16 %v645, %v643
        %v704 = vpack.c.b16 %v648, %v646
        %v705 = vpack.c.b16 %v649, %v647
        %v706 = vpack.c.b16 %v652, %v650
        %v707 = vpack.c.b16 %v653, %v651
        %v708 = vpack.c.b16 %v656, %v654
        %v709 = vpack.c.b16 %v657, %v655
        %v710 = vpack.c.b16 %v660, %v658
        %v711 = vpack.c.b16 %v661, %v659
        %v712 = vpack.c.b16 %v664, %v662
        %v713 = vpack.c.b16 %v665, %v663
        %v714 = vpack.c.b16 %v668, %v666
        %v715 = vpack.c.b16 %v669, %v667
        %v716 = vpack.c.b16 %v672, %v670
        %v717 = vpack.c.b16 %v673, %v671
        %v718 = vpack.c.b16 %v676, %v674
        %v719 = vpack.c.b16 %v677, %v675
        %v720 = vpack.c.b16 %v680, %v678
        %v721 = vpack.c.b16 %v681, %v679
        %v722 = vpack.c.b16 %v684, %v682
        %v723 = vpack.c.b16 %v685, %v683
        %v724 = vpack.c.b16 %v688, %v686
        %v725 = vpack.c.b16 %v689, %v687
        %v726 = vpack.c.b16 %v692, %v690
        %v727 = vpack.c.b16 %v693, %v691
        %v728 = vpack.c.b16 %v696, %v694
        %v729 = vpack.c.b16 %v697, %v695
        %762 = vmatprep.subr.bf16.mxu0 %v699
        %763 = vmatpush1.bf16.msra.mxu0 %v698
        %764 = vmatprep.subr.bf16.mxu0 %v701
        %765 = vmatpush1.bf16.msra.mxu0 %v700
        %766 = vmatprep.subr.bf16.mxu0 %v703
        %767 = vmatpush1.bf16.msra.mxu0 %v702
        %768 = vmatprep.subr.bf16.mxu0 %v705
        %769 = vmatpush1.bf16.msra.mxu0 %v704
        %770 = vmatprep.subr.bf16.mxu0 %v707
        %771 = vmatpush1.bf16.msra.mxu0 %v706
        %772 = vmatprep.subr.bf16.mxu0 %v709
        %773 = vmatpush1.bf16.msra.mxu0 %v708
        %774 = vmatprep.subr.bf16.mxu0 %v711
        %775 = vmatpush1.bf16.msra.mxu0 %v710
        %776 = vmatprep.subr.bf16.mxu0 %v713
        %777 = vmatpush1.bf16.msra.mxu0 %v712
        %778 = vmatprep.subr.bf16.mxu0 %v715
        %779 = vmatpush1.bf16.msra.mxu0 %v714
        %780 = vmatprep.subr.bf16.mxu0 %v717
        %781 = vmatpush1.bf16.msra.mxu0 %v716
        %782 = vmatprep.subr.bf16.mxu0 %v719
        %783 = vmatpush1.bf16.msra.mxu0 %v718
        %784 = vmatprep.subr.bf16.mxu0 %v721
        %785 = vmatpush1.bf16.msra.mxu0 %v720
        %786 = vmatprep.subr.bf16.mxu0 %v723
        %787 = vmatpush1.bf16.msra.mxu0 %v722
        %788 = vmatprep.subr.bf16.mxu0 %v725
        %789 = vmatpush1.bf16.msra.mxu0 %v724
        %790 = vmatprep.subr.bf16.mxu0 %v727
        %791 = vmatpush1.bf16.msra.mxu0 %v726
        %792 = vmatprep.subr.bf16.mxu0 %v729
        %793 = vmatpush1.bf16.msra.mxu0 %v728
        %794 = vmatprep.mubr.bf16.mxu0 %v555
        %795 = vmatmul.mubr.bf16.gmra.mrb[0].mxu0 %v554
        %v796 = vpop.f32.mrb[0].mxu0
        %v797 = vadd.f32 0.0, %v796
        %v798 = vpop.f32.mrb[0].mxu0
        %v799 = vadd.f32 0.0, %v798
        %v800 = vpop.f32.mrb[0].mxu0
        %v801 = vadd.f32 0.0, %v800
        %v802 = vpop.f32.mrb[0].mxu0
        %v803 = vadd.f32 0.0, %v802
        %804 = vmatprep.mubr.bf16.mxu0 %v557
        %805 = vmatmul.mubr.bf16.gmra.mrb[0].mxu0 %v556
        %v806 = vpop.f32.mrb[0].mxu0
        %v807 = vadd.f32 0.0, %v806
        %v808 = vpop.f32.mrb[0].mxu0
        %v809 = vadd.f32 0.0, %v808
        %v810 = vpop.f32.mrb[0].mxu0
        %v811 = vadd.f32 0.0, %v810
        %v812 = vpop.f32.mrb[0].mxu0
        %v813 = vadd.f32 0.0, %v812
        %814 = vmatprep.mubr.bf16.mxu0 %v559
        %815 = vmatmul.mubr.bf16.gmra.mrb[0].mxu0 %v558
        %v816 = vpop.f32.mrb[0].mxu0
        %v817 = vadd.f32 0.0, %v816
        %v818 = vpop.f32.mrb[0].mxu0
        %v819 = vadd.f32 0.0, %v818
        %v820 = vpop.f32.mrb[0].mxu0
        %v821 = vadd.f32 0.0, %v820
        %v822 = vpop.f32.mrb[0].mxu0
        %v823 = vadd.f32 0.0, %v822
        %824 = vmatprep.mubr.bf16.mxu0 %v561
        %825 = vmatmul.mubr.bf16.gmra.mrb[0].mxu0 %v560
        %v826 = vpop.f32.mrb[0].mxu0
        %v827 = vadd.f32 0.0, %v826
        %v828 = vpop.f32.mrb[0].mxu0
        %v829 = vadd.f32 0.0, %v828
        %v830 = vpop.f32.mrb[0].mxu0
        %v831 = vadd.f32 0.0, %v830
        %v832 = vpop.f32.mrb[0].mxu0
        %v833 = vadd.f32 0.0, %v832
        %834 = vmatprep.mubr.bf16.mxu0 %v563
        %835 = vmatmul.mubr.bf16.gmra.mrb[0].mxu0 %v562
        %v836 = vpop.f32.mrb[0].mxu0
        %v837 = vadd.f32 0.0, %v836
        %v838 = vpop.f32.mrb[0].mxu0
        %v839 = vadd.f32 0.0, %v838
        %v840 = vpop.f32.mrb[0].mxu0
        %v841 = vadd.f32 0.0, %v840
        %v842 = vpop.f32.mrb[0].mxu0
        %v843 = vadd.f32 0.0, %v842
        %844 = vmatprep.mubr.bf16.mxu0 %v565
        %845 = vmatmul.mubr.bf16.gmra.mrb[0].mxu0 %v564
        %v846 = vpop.f32.mrb[0].mxu0
        %v847 = vadd.f32 0.0, %v846
        %v848 = vpop.f32.mrb[0].mxu0
        %v849 = vadd.f32 0.0, %v848
        %v850 = vpop.f32.mrb[0].mxu0
        %v851 = vadd.f32 0.0, %v850
        %v852 = vpop.f32.mrb[0].mxu0
        %v853 = vadd.f32 0.0, %v852
        %854 = vmatprep.mubr.bf16.mxu0 %v567
        %855 = vmatmul.mubr.bf16.gmra.mrb[0].mxu0 %v566
        %v856 = vpop.f32.mrb[0].mxu0
        %v857 = vadd.f32 0.0, %v856
        %v858 = vpop.f32.mrb[0].mxu0
        %v859 = vadd.f32 0.0, %v858
        %v860 = vpop.f32.mrb[0].mxu0
        %v861 = vadd.f32 0.0, %v860
        %v862 = vpop.f32.mrb[0].mxu0
        %v863 = vadd.f32 0.0, %v862
        %864 = vmatprep.mubr.bf16.mxu0 %v569
        %865 = vmatmul.mubr.bf16.gmra.mrb[0].mxu0 %v568
        %v866 = vpop.f32.mrb[0].mxu0
        %v867 = vadd.f32 0.0, %v866
        %v868 = vpop.f32.mrb[0].mxu0
        %v869 = vadd.f32 0.0, %v868
        %v870 = vpop.f32.mrb[0].mxu0
        %v871 = vadd.f32 0.0, %v870
        %v872 = vpop.f32.mrb[0].mxu0
        %v873 = vadd.f32 0.0, %v872
        %874 = vdwg.mxu0
        %s875 = sld [smem:[#allocation4 + %s27]]
        %v876 = vstv %s875
        %v877 = vmul.f32 %v378, %v876
        %v878 = vmul.f32 %v379, %v876
        %v879 = vmul.f32 %v380, %v876
        %v880 = vmul.f32 %v381, %v876
        %v881 = vmul.f32 %v382, %v876
        %v882 = vmul.f32 %v383, %v876
        %v883 = vmul.f32 %v384, %v876
        %v884 = vmul.f32 %v385, %v876
        %v885 = vmul.f32 %v386, %v876
        %v886 = vmul.f32 %v387, %v876
        %v887 = vmul.f32 %v388, %v876
        %v888 = vmul.f32 %v389, %v876
        %v889 = vmul.f32 %v390, %v876
        %v890 = vmul.f32 %v391, %v876
        %v891 = vmul.f32 %v392, %v876
        %v892 = vmul.f32 %v393, %v876
        %v893 = vmul.f32 %v797, %v877
        %v894 = vmul.f32 %v799, %v877
        %v895 = vmul.f32 %v801, %v878
        %v896 = vmul.f32 %v803, %v878
        %v897 = vmul.f32 %v807, %v879
        %v898 = vmul.f32 %v809, %v879
        %v899 = vmul.f32 %v811, %v880
        %v900 = vmul.f32 %v813, %v880
        %v901 = vmul.f32 %v817, %v881
        %v902 = vmul.f32 %v819, %v881
        %v903 = vmul.f32 %v821, %v882
        %v904 = vmul.f32 %v823, %v882
        %v905 = vmul.f32 %v827, %v883
        %v906 = vmul.f32 %v829, %v883
        %v907 = vmul.f32 %v831, %v884
        %v908 = vmul.f32 %v833, %v884
        %v909 = vmul.f32 %v837, %v885
        %v910 = vmul.f32 %v839, %v885
        %v911 = vmul.f32 %v841, %v886
        %v912 = vmul.f32 %v843, %v886
        %v913 = vmul.f32 %v847, %v887
        %v914 = vmul.f32 %v849, %v887
        %v915 = vmul.f32 %v851, %v888
        %v916 = vmul.f32 %v853, %v888
        %v917 = vmul.f32 %v857, %v889
        %v918 = vmul.f32 %v859, %v889
        %v919 = vmul.f32 %v861, %v890
        %v920 = vmul.f32 %v863, %v890
        %v921 = vmul.f32 %v867, %v891
        %v922 = vmul.f32 %v869, %v891
        %v923 = vmul.f32 %v871, %v892
        %v924 = vmul.f32 %v873, %v892
        %925 = vst [vmem:[%s263] sm:$0xff] %v893
        %926 = vst [vmem:[%s263 + $0x8] sm:$0xff] %v894
        %927 = vst [vmem:[%s263 + $0x10] sm:$0xff] %v895
        %928 = vst [vmem:[%s263 + $0x18] sm:$0xff] %v896
        %929 = vst [vmem:[%s263 + $0x20] sm:$0xff] %v897
        %930 = vst [vmem:[%s263 + $0x28] sm:$0xff] %v898
        %931 = vst [vmem:[%s263 + $0x30] sm:$0xff] %v899
        %932 = vst [vmem:[%s263 + $0x38] sm:$0xff] %v900
        %933 = vst [vmem:[%s263 + $0x40] sm:$0xff] %v901
        %934 = vst [vmem:[%s263 + $0x48] sm:$0xff] %v902
        %935 = vst [vmem:[%s263 + $0x50] sm:$0xff] %v903
        %936 = vst [vmem:[%s263 + $0x58] sm:$0xff] %v904
        %937 = vst [vmem:[%s263 + $0x60] sm:$0xff] %v905
        %938 = vst [vmem:[%s263 + $0x68] sm:$0xff] %v906
        %939 = vst [vmem:[%s263 + $0x70] sm:$0xff] %v907
        %940 = vst [vmem:[%s263 + $0x78] sm:$0xff] %v908
        %941 = vst [vmem:[%s263 + $0x80] sm:$0xff] %v909
        %942 = vst [vmem:[%s263 + $0x88] sm:$0xff] %v910
        %943 = vst [vmem:[%s263 + $0x90] sm:$0xff] %v911
        %944 = vst [vmem:[%s263 + $0x98] sm:$0xff] %v912
        %945 = vst [vmem:[%s263 + $0xa0] sm:$0xff] %v913
        %946 = vst [vmem:[%s263 + $0xa8] sm:$0xff] %v914
        %947 = vst [vmem:[%s263 + $0xb0] sm:$0xff] %v915
        %948 = vst [vmem:[%s263 + $0xb8] sm:$0xff] %v916
        %949 = vst [vmem:[%s263 + $0xc0] sm:$0xff] %v917
        %950 = vst [vmem:[%s263 + $0xc8] sm:$0xff] %v918
        %951 = vst [vmem:[%s263 + $0xd0] sm:$0xff] %v919
        %952 = vst [vmem:[%s263 + $0xd8] sm:$0xff] %v920
        %953 = vst [vmem:[%s263 + $0xe0] sm:$0xff] %v921
        %954 = vst [vmem:[%s263 + $0xe8] sm:$0xff] %v922
        %955 = vst [vmem:[%s263 + $0xf0] sm:$0xff] %v923
        %956 = vst [vmem:[%s263 + $0xf8] sm:$0xff] %v924
        %s957 = smul.u32 16, %s27
        %s958 = smul.u32 2, %s26
        %p959 = scmp.lt.s32.totalorder %s957, 95
        %s960 = scalar_select %p959, %s957, 95
        %p961 = scmp.lt.s32.totalorder %s958, 1
        %s962 = scalar_select %p961, %s958, 1
        %s963 = smul.addr %s960, 2
        %s964 = sadd.s32 %s962, %s963
        %s965 = smul.addr %s964, 8
        %s966 = scalar_lea.vmem %s4, %s965
        // Predicated region
        $region37: #{_forward.1} parent=31 // pred_check
          %p967 = pneg %p131
        $region38: #{_forward.1} parent=31 // pred_check_branch
          %969 = sbr.rel (%p967) target = $region40
        $region39: #{_forward.1} parent=31 // pred_region
          %s970 = smul.u32 16, %s27
          %s971 = smul.u32 2, %s26
        $region40: #{_forward.1} parent=31 // pred_fallthru
          _
      $region32: #{_forward.1} parent=5 // pred_fallthru
        _
      %p972 = scmp.le.s32.totalorder 2, %s17
      // Predicated region
      $region41: #{_forward.1} parent=5 // pred_check
        %p973 = pneg %p972
      $region42: #{_forward.1} parent=5 // pred_check_branch
        %975 = sbr.rel (%p973) target = $region44
      $region43: #{_forward.1} parent=5 // pred_region
        %s976 = ssub.s32 %s17, 2
        // Predicated region
        $region45: #{_forward.1} parent=43 // pred_check
          %p977 = pneg %p137
        $region46: #{_forward.1} parent=43 // pred_check_branch
          %979 = sbr.rel (%p977) target = $region48
        $region47: #{_forward.1} parent=43 // pred_region
          %s980 = smul.u32 16, %s29
          %s981 = smul.u32 2, %s28
          %p982 = scmp.lt.s32.totalorder %s980, 95
          %s983 = scalar_select %p982, %s980, 95
          %p984 = scmp.lt.s32.totalorder %s981, 1
          %s985 = scalar_select %p984, %s981, 1
          %s986 = smul.addr %s983, 2
          %s987 = sadd.s32 %s985, %s986
          %s988 = smul.addr %s987, 8
          %s989 = scalar_lea.vmem %s4, %s988
        $region48: #{_forward.1} parent=43 // pred_fallthru
          _
      $region44: #{_forward.1} parent=5 // pred_fallthru
        _
    $region6: #{_forward.1} parent=1 // loop_footer
      %s21 = sadd.s32 1, %s17
    $region7: #{_forward.1} parent=1 // loop_footer_branch
      %16 = sbr.rel target = $region3
    $region8: #{_forward.1} parent=1 // loop_exit
      _
    %990 = vsyncpa [#allocation5], 1
    %s991 = scalar_lea.sflag [#allocation5], 1
    %992 = vsyncpa %s991, 1

</llo_original>
